<compile_context>
chip_gen: v6e
topology: v6e:2x2x1
jax: 0.10.0
libtpu: 0.0.40
codegen_flags: <defaults>
</compile_context>

<pallas_src>
import itertools

import jax
import jax.numpy as jnp
import numpy as np
from jax.experimental import pallas as pl
from jax.experimental.pallas import tpu as pltpu

P_DIM = 18          # parameter vector length (the module slices up to [..., 14:18])
_TGT_W = P_DIM + 3  # scaled params ++ [is_line, is_circle, is_arc]

try:  # host-side Hungarian solve (outside the kernel)
    from scipy.optimize import linear_sum_assignment as _scipy_lsa
except Exception:  # pragma: no cover
    _scipy_lsa = None


def _round_up(x, m):
    return -(-x // m) * m


def _cost_kernel(tgt_ref, onehot_ref, predT_ref, clsT_ref, out_ref):
    # tgt_ref    : [tile_t, 21]      scaled target params (0:18) ++ class masks (18:21)
    # onehot_ref : [tile_t, C]       one_hot(tgt_ids); zero rows for padded targets
    # predT_ref  : [18, tile_n]      scaled prediction params, transposed (queries on lanes)
    # clsT_ref   : [C, tile_n]       cost_class * (pos_focal - neg_focal), transposed
    # out_ref    : [tile_t, tile_n]  transposed cost tile C^T (targets on sublanes)
    tgt = tgt_ref[...]
    predT = predT_ref[...]

    # Per-target class-cost gather on the otherwise-idle MXU; HIGHEST keeps the
    # f32 one-hot gather exact (K = num_classes is tiny, so the extra passes are free).
    cls = jnp.dot(onehot_ref[...], clsT_ref[...],
                  preferred_element_type=jnp.float32,
                  precision=jax.lax.Precision.HIGHEST)

    def l1(lo, hi):
        # sum_d |pred[d, :] - tgt[:, d]| over a static dim range (broadcast L1).
        d = jnp.abs(predT[lo:lo + 1, :] - tgt[:, lo:lo + 1])
        for k in range(lo + 1, hi):
            d = d + jnp.abs(predT[k:k + 1, :] - tgt[:, k:k + 1])
        return d

    # cost_bbox (and 2/3 for arcs) is pre-folded into predT/tgt scaling, so the
    # shared 14:18 term needs no multiply and the class terms need only the 0/1
    # indicator columns.  Single fused expression -> one store per tile.
    out_ref[...] = (cls
                    + l1(14, 18)
                    + l1(0, 4) * tgt[:, P_DIM:P_DIM + 1]        # lines   (id == 0)
                    + l1(4, 8) * tgt[:, P_DIM + 1:P_DIM + 2]    # circles (id == 1)
                    + l1(8, 14) * tgt[:, P_DIM + 2:P_DIM + 3])  # arcs    (id == 2, 2/3 folded)
    # TODO(synk): cost_giou > 0 calls generalized_box_iou / box_cxcywh_to_xyxy
    # (helpers external to this module); this implementation covers cost_giou=0.


def _compute_cost_blocks(pred_logits, pred_params, tgt_labels_list, tgt_params_list, *,
                         cost_class=1.0, cost_bbox=1.0, focal_alpha=0.25,
                         tile_n_cap=512, tile_t_cap=512):
    """Per-batch block-diagonal cost blocks, transposed.

    Returns Ct of shape [bs, T_pad, N_pad]; Ct[b, t, n] is the matching cost of
    target t (of batch b) vs. query n (of batch b), valid for t < sizes[b], n < nq.
    """
    bs, nq, num_classes = pred_logits.shape
    sizes = [int(p.shape[0]) for p in tgt_params_list]
    T_max = max(sizes) if sizes else 0
    if T_max == 0:
        return jnp.zeros((bs, 0, nq), jnp.float32)

    # --- tiling: queries on lanes (pad to 128), targets on sublanes (pad to 8) ---
    N_pad0 = _round_up(nq, 128)
    T_pad0 = _round_up(T_max, 8)
    n_tiles = -(-N_pad0 // tile_n_cap)
    t_tiles = -(-T_pad0 // tile_t_cap)
    # Guarantee >=2 parallel grid steps (v7x has 2 TensorCores) when it is free.
    if bs * n_tiles * t_tiles < 2 and N_pad0 % 256 == 0:
        n_tiles = max(n_tiles, 2)
    tile_n = _round_up(-(-N_pad0 // n_tiles), 128)
    tile_t = _round_up(-(-T_pad0 // t_tiles), 8)
    N_pad = tile_n * n_tiles
    T_pad = tile_t * t_tiles

    # Fold cost_bbox (and the 2/3 arc factor) into the parameter scaling:
    # |s*p - s*t| = s*|p - t|; dims 8:14 only ever contribute to the arc term.
    dim_scale = jnp.concatenate([
        jnp.full((8,), cost_bbox, jnp.float32),
        jnp.full((6,), cost_bbox * (2.0 / 3.0), jnp.float32),
        jnp.full((4,), cost_bbox, jnp.float32)])

    # Predictions: scaled, transposed, lane-padded -> [bs, 18, N_pad].
    predT = (pred_params.astype(jnp.float32) * dim_scale).transpose(0, 2, 1)
    predT = jnp.pad(predT, ((0, 0), (0, 0), (0, N_pad - nq)))

    # Focal class cost hoisted out of the kernel (O(N*C) XLA work, computed once,
    # not per column tile) -> [bs, C, N_pad], cost_class folded in.
    logits = pred_logits.astype(jnp.float32)
    p = jax.nn.sigmoid(logits)
    neg = (1.0 - focal_alpha) * (p * p) * (-jnp.log(1.0 - p + 1e-8))
    pos = focal_alpha * ((1.0 - p) * (1.0 - p)) * (-jnp.log(p + 1e-8))
    clsT = ((pos - neg) * cost_class).transpose(0, 2, 1)
    clsT = jnp.pad(clsT, ((0, 0), (0, 0), (0, N_pad - nq)))

    # Per-batch target slab [T_pad, 21] (scaled params ++ class indicators) and
    # one-hot [T_pad, C]; padded rows are zero (their outputs are sliced away).
    tgt_slabs, onehots = [], []
    for ids, prm in zip(tgt_labels_list, tgt_params_list):
        ids = ids.astype(jnp.int32)
        t = int(prm.shape[0])
        prm = prm.astype(jnp.float32) * dim_scale
        masks = jnp.stack([(ids == 0), (ids == 1), (ids == 2)], axis=1).astype(jnp.float32)
        slab = jnp.concatenate([prm, masks], axis=1)
        tgt_slabs.append(jnp.pad(slab, ((0, T_pad - t), (0, 0))))
        oh = jax.nn.one_hot(ids, num_classes, dtype=jnp.float32)
        onehots.append(jnp.pad(oh, ((0, T_pad - t), (0, 0))))
    tgt_slab = jnp.stack(tgt_slabs)   # [bs, T_pad, 21]
    onehot = jnp.stack(onehots)       # [bs, T_pad, C]

    grid = (bs, T_pad // tile_t, N_pad // tile_n)
    Ct = pl.pallas_call(
        _cost_kernel,
        out_shape=jax.ShapeDtypeStruct((bs, T_pad, N_pad), jnp.float32),
        grid=grid,
        in_specs=[
            pl.BlockSpec((None, tile_t, _TGT_W), lambda b, ti, ni: (b, ti, 0)),
            pl.BlockSpec((None, tile_t, num_classes), lambda b, ti, ni: (b, ti, 0)),
            pl.BlockSpec((None, P_DIM, tile_n), lambda b, ti, ni: (b, 0, ni)),
            pl.BlockSpec((None, num_classes, tile_n), lambda b, ti, ni: (b, 0, ni)),
        ],
        out_specs=pl.BlockSpec((None, tile_t, tile_n), lambda b, ti, ni: (b, ti, ni)),
        compiler_params=pltpu.CompilerParams(
            dimension_semantics=("parallel", "parallel", "parallel"),
            vmem_limit_bytes=32 * 1024 * 1024),
    )(tgt_slab, onehot, predT, clsT)
    return Ct


def _linear_sum_assignment(c):
    # Host-side min-cost assignment on a [nq, nt] cost matrix.
    # TODO(synk): the Hungarian algorithm is inherently sequential; it stays on host.
    nq, nt = c.shape
    if nt == 0:
        return np.zeros((0,), np.int64), np.zeros((0,), np.int64)
    if _scipy_lsa is not None:
        i, j = _scipy_lsa(c)
        return np.asarray(i, np.int64), np.asarray(j, np.int64)
    # Exact brute-force fallback (tiny demo sizes only).
    transpose = nt > nq
    m = c.T if transpose else c
    nr, nc = m.shape
    count = 1
    for r in range(nr, nr - nc, -1):
        count *= r
    if count > 100000:
        raise RuntimeError("scipy is required for linear_sum_assignment at this size")
    best_rows, best_cost = None, None
    for rows in itertools.permutations(range(nr), nc):
        cost = sum(m[rows[j], j] for j in range(nc))
        if best_cost is None or cost < best_cost:
            best_cost, best_rows = cost, rows
    row_ind = np.asarray(best_rows, np.int64)
    col_ind = np.arange(nc, dtype=np.int64)
    if transpose:
        row_ind, col_ind = col_ind, row_ind
    order = np.argsort(row_ind)
    return row_ind[order], col_ind[order]


def hungarian_matcher_forward(outputs, targets, *, cost_class=1.0, cost_bbox=1.0,
                              focal_alpha=0.25):
    """JAX/Pallas equivalent of HungarianMatcher.forward
    (to_xyxy=False, min_permut_loss=False, cost_giou=0).  Returns the list of
    per-batch (query_indices, target_indices), like the PyTorch module."""
    labels = [t["labels"] for t in targets]
    params = [t["parameters"] for t in targets]
    Ct = _compute_cost_blocks(outputs["pred_logits"], outputs["pred_params"],
                              labels, params,
                              cost_class=cost_class, cost_bbox=cost_bbox,
                              focal_alpha=focal_alpha)
    Ct = np.asarray(jax.block_until_ready(Ct))   # single device->host transfer
    nq = int(outputs["pred_logits"].shape[1])
    indices = []
    for b, prm in enumerate(params):
        sz = int(prm.shape[0])
        indices.append(_linear_sum_assignment(Ct[b, :sz, :nq].T))
    return indices


def _reference_cost_matrix(outputs, targets, *, cost_class=1.0, cost_bbox=1.0,
                           focal_alpha=0.25):
    """Plain numpy reference mirroring the PyTorch code (full cross-batch C)."""
    logits = np.asarray(outputs["pred_logits"], np.float32)
    params = np.asarray(outputs["pred_params"], np.float32)
    bs, nq, _ = logits.shape
    out_prob = 1.0 / (1.0 + np.exp(-logits.reshape(bs * nq, -1)))
    out_param = params.reshape(bs * nq, -1)
    tgt_ids = np.concatenate([np.asarray(t["labels"]) for t in targets])
    tgt_param = np.concatenate([np.asarray(t["parameters"], np.float32) for t in targets])

    alpha, gamma = focal_alpha, 2.0
    neg = (1 - alpha) * out_prob ** gamma * -np.log(1 - out_prob + 1e-8)
    pos = alpha * (1 - out_prob) ** gamma * -np.log(out_prob + 1e-8)
    cc = pos[:, tgt_ids] - neg[:, tgt_ids]

    def cdist1(a, b):
        return np.abs(a[:, None, :] - b[None, :, :]).sum(-1)

    cb = cdist1(out_param[:, 14:18], tgt_param[:, 14:18])
    cb[:, tgt_ids == 0] += cdist1(out_param[:, 0:4], tgt_param[tgt_ids == 0][:, 0:4])
    cb[:, tgt_ids == 1] += cdist1(out_param[:, 4:8], tgt_param[tgt_ids == 1][:, 4:8])
    cb[:, tgt_ids == 2] += cdist1(out_param[:, 8:14], tgt_param[tgt_ids == 2][:, 8:14]) * 2 / 3
    C = cost_bbox * cb + cost_class * cc
    return C.reshape(bs, nq, -1)


def _check_blocks(Ct, C_ref, sizes, nq):
    """Validate the per-batch block-diagonal blocks against the full reference."""
    off = 0
    for b, sz in enumerate(sizes):
        np.testing.assert_allclose(Ct[b, :sz, :nq].T, C_ref[b, :, off:off + sz],
                                   rtol=1e-5, atol=1e-5)
        off += sz


if __name__ == "__main__":
    key = jax.random.PRNGKey(0)

    # --- Test 1: tiny demo, full forward (cost blocks + assignment) -------------
    bs, num_queries, num_classes = 2, 8, 4
    k1, k2, k3, k4 = jax.random.split(key, 4)
    outputs = {
        "pred_logits": jax.random.normal(k1, (bs, num_queries, num_classes), jnp.float32),
        "pred_params": jax.random.uniform(k2, (bs, num_queries, P_DIM), jnp.float32),
    }
    targets = [
        {"labels": jnp.array([0, 1, 2], jnp.int32),
         "parameters": jax.random.uniform(k3, (3, P_DIM), jnp.float32)},
        {"labels": jnp.array([0, 1], jnp.int32),
         "parameters": jax.random.uniform(k4, (2, P_DIM), jnp.float32)},
    ]
    sizes = [int(t["parameters"].shape[0]) for t in targets]

    Ct = _compute_cost_blocks(outputs["pred_logits"], outputs["pred_params"],
                              [t["labels"] for t in targets],
                              [t["parameters"] for t in targets])
    Ct = np.asarray(jax.block_until_ready(Ct))
    C_ref = _reference_cost_matrix(outputs, targets)
    _check_blocks(Ct, C_ref, sizes, num_queries)

    indices = hungarian_matcher_forward(outputs, targets)
    assert len(indices) == bs
    for b, (i, j) in enumerate(indices):
        assert len(i) == len(j) == min(num_queries, sizes[b])

    # --- Test 2: exercise a multi-tile (batch, T, N) grid; cost blocks only -----
    bs2, nq2 = 2, 300            # N_pad = 384 -> 3 query tiles at tile_n_cap=128
    nt0, nt1 = 100, 70           # T_pad = 112 -> 2 target tiles at tile_t_cap=64
    k5, k6, k7, k8, k9, k10 = jax.random.split(jax.random.PRNGKey(1), 6)
    outputs2 = {
        "pred_logits": jax.random.normal(k5, (bs2, nq2, num_classes), jnp.float32),
        "pred_params": jax.random.uniform(k6, (bs2, nq2, P_DIM), jnp.float32),
    }
    targets2 = [
        {"labels": jax.random.randint(k7, (nt0,), 0, num_classes, jnp.int32),
         "parameters": jax.random.uniform(k8, (nt0, P_DIM), jnp.float32)},
        {"labels": jax.random.randint(k9, (nt1,), 0, num_classes, jnp.int32),
         "parameters": jax.random.uniform(k10, (nt1, P_DIM), jnp.float32)},
    ]
    Ct2 = _compute_cost_blocks(outputs2["pred_logits"], outputs2["pred_params"],
                               [t["labels"] for t in targets2],
                               [t["parameters"] for t in targets2],
                               tile_n_cap=128, tile_t_cap=64)
    Ct2 = np.asarray(jax.block_until_ready(Ct2))
    C2_ref = _reference_cost_matrix(outputs2, targets2)
    _check_blocks(Ct2, C2_ref, [nt0, nt1], nq2)

    print("KERNEL_OK")
</pallas_src>

<mosaic_0001>
module attributes {stable_mosaic.version = 11 : i64} {
  func.func @_cost_kernel(%arg0: i32, %arg1: i32, %arg2: i32, %arg3: memref<1x8x21xf32, #tpu.memory_space<vmem>>, %arg4: memref<1x8x4xf32, #tpu.memory_space<vmem>>, %arg5: memref<1x18x128xf32, #tpu.memory_space<vmem>>, %arg6: memref<1x4x128xf32, #tpu.memory_space<vmem>>, %arg7: memref<1x8x128xf32, #tpu.memory_space<vmem>>) attributes {dimension_semantics = [#tpu.dimension_semantics<parallel>, #tpu.dimension_semantics<parallel>, #tpu.dimension_semantics<parallel>], iteration_bounds = array<i64: 2, 1, 1>, scalar_prefetch = 0 : i64, scratch_operands = 0 : i64, tpu.core_type = #tpu.core_type<tc>, window_params = [{transform_indices = @transform_0, window_bounds = array<i64: 1, 8, 21>}, {transform_indices = @transform_1, window_bounds = array<i64: 1, 8, 4>}, {transform_indices = @transform_2, window_bounds = array<i64: 1, 18, 128>}, {transform_indices = @transform_3, window_bounds = array<i64: 1, 4, 128>}, {transform_indices = @transform_4, window_bounds = array<i64: 1, 8, 128>}]} {
    %c0 = arith.constant 0 : index
    %c0_0 = arith.constant 0 : index
    %c0_1 = arith.constant 0 : index
    %0 = vector.load %arg3[%c0, %c0_0, %c0_1] : memref<1x8x21xf32, #tpu.memory_space<vmem>>, vector<1x8x21xf32>
    %1 = vector.shape_cast %0 : vector<1x8x21xf32> to vector<8x21xf32>
    %c0_2 = arith.constant 0 : index
    %c0_3 = arith.constant 0 : index
    %c0_4 = arith.constant 0 : index
    %2 = vector.load %arg5[%c0_2, %c0_3, %c0_4] : memref<1x18x128xf32, #tpu.memory_space<vmem>>, vector<1x18x128xf32>
    %3 = vector.shape_cast %2 : vector<1x18x128xf32> to vector<18x128xf32>
    %c0_5 = arith.constant 0 : index
    %c0_6 = arith.constant 0 : index
    %c0_7 = arith.constant 0 : index
    %4 = vector.load %arg4[%c0_5, %c0_6, %c0_7] : memref<1x8x4xf32, #tpu.memory_space<vmem>>, vector<1x8x4xf32>
    %5 = vector.shape_cast %4 : vector<1x8x4xf32> to vector<8x4xf32>
    %c0_8 = arith.constant 0 : index
    %c0_9 = arith.constant 0 : index
    %c0_10 = arith.constant 0 : index
    %6 = vector.load %arg6[%c0_8, %c0_9, %c0_10] : memref<1x4x128xf32, #tpu.memory_space<vmem>>, vector<1x4x128xf32>
    %7 = vector.shape_cast %6 : vector<1x4x128xf32> to vector<4x128xf32>
    %cst = arith.constant dense<0.000000e+00> : vector<8x128xf32>
    %8 = tpu.matmul %5, %7, %cst {dimension_numbers = #tpu.dot_dimension_numbers<[1], [0], [0], [1], [0, 0, 1, 1], [], []>, precision = #tpu.contract_precision<fp32>} : vector<8x4xf32>, vector<4x128xf32>, vector<8x128xf32> -> vector<8x128xf32>
    %9 = vector.extract_strided_slice %3 {offsets = [14, 0], sizes = [1, 128], strides = [1, 1]} : vector<18x128xf32> to vector<1x128xf32>
    %10 = vector.extract_strided_slice %1 {offsets = [0, 14], sizes = [8, 1], strides = [1, 1]} : vector<8x21xf32> to vector<8x1xf32>
    %11 = vector.broadcast %9 : vector<1x128xf32> to vector<8x128xf32>
    %12 = vector.broadcast %10 : vector<8x1xf32> to vector<8x128xf32>
    %13 = arith.subf %11, %12 : vector<8x128xf32>
    %14 = math.absf %13 : vector<8x128xf32>
    %15 = vector.extract_strided_slice %3 {offsets = [15, 0], sizes = [1, 128], strides = [1, 1]} : vector<18x128xf32> to vector<1x128xf32>
    %16 = vector.extract_strided_slice %1 {offsets = [0, 15], sizes = [8, 1], strides = [1, 1]} : vector<8x21xf32> to vector<8x1xf32>
    %17 = vector.broadcast %15 : vector<1x128xf32> to vector<8x128xf32>
    %18 = vector.broadcast %16 : vector<8x1xf32> to vector<8x128xf32>
    %19 = arith.subf %17, %18 : vector<8x128xf32>
    %20 = math.absf %19 : vector<8x128xf32>
    %21 = arith.addf %14, %20 : vector<8x128xf32>
    %22 = vector.extract_strided_slice %3 {offsets = [16, 0], sizes = [1, 128], strides = [1, 1]} : vector<18x128xf32> to vector<1x128xf32>
    %23 = vector.extract_strided_slice %1 {offsets = [0, 16], sizes = [8, 1], strides = [1, 1]} : vector<8x21xf32> to vector<8x1xf32>
    %24 = vector.broadcast %22 : vector<1x128xf32> to vector<8x128xf32>
    %25 = vector.broadcast %23 : vector<8x1xf32> to vector<8x128xf32>
    %26 = arith.subf %24, %25 : vector<8x128xf32>
    %27 = math.absf %26 : vector<8x128xf32>
    %28 = arith.addf %21, %27 : vector<8x128xf32>
    %29 = vector.extract_strided_slice %3 {offsets = [17, 0], sizes = [1, 128], strides = [1, 1]} : vector<18x128xf32> to vector<1x128xf32>
    %30 = vector.extract_strided_slice %1 {offsets = [0, 17], sizes = [8, 1], strides = [1, 1]} : vector<8x21xf32> to vector<8x1xf32>
    %31 = vector.broadcast %29 : vector<1x128xf32> to vector<8x128xf32>
    %32 = vector.broadcast %30 : vector<8x1xf32> to vector<8x128xf32>
    %33 = arith.subf %31, %32 : vector<8x128xf32>
    %34 = math.absf %33 : vector<8x128xf32>
    %35 = arith.addf %28, %34 : vector<8x128xf32>
    %36 = arith.addf %8, %35 : vector<8x128xf32>
    %37 = vector.extract_strided_slice %3 {offsets = [0, 0], sizes = [1, 128], strides = [1, 1]} : vector<18x128xf32> to vector<1x128xf32>
    %38 = vector.extract_strided_slice %1 {offsets = [0, 0], sizes = [8, 1], strides = [1, 1]} : vector<8x21xf32> to vector<8x1xf32>
    %39 = vector.broadcast %37 : vector<1x128xf32> to vector<8x128xf32>
    %40 = vector.broadcast %38 : vector<8x1xf32> to vector<8x128xf32>
    %41 = arith.subf %39, %40 : vector<8x128xf32>
    %42 = math.absf %41 : vector<8x128xf32>
    %43 = vector.extract_strided_slice %3 {offsets = [1, 0], sizes = [1, 128], strides = [1, 1]} : vector<18x128xf32> to vector<1x128xf32>
    %44 = vector.extract_strided_slice %1 {offsets = [0, 1], sizes = [8, 1], strides = [1, 1]} : vector<8x21xf32> to vector<8x1xf32>
    %45 = vector.broadcast %43 : vector<1x128xf32> to vector<8x128xf32>
    %46 = vector.broadcast %44 : vector<8x1xf32> to vector<8x128xf32>
    %47 = arith.subf %45, %46 : vector<8x128xf32>
    %48 = math.absf %47 : vector<8x128xf32>
    %49 = arith.addf %42, %48 : vector<8x128xf32>
    %50 = vector.extract_strided_slice %3 {offsets = [2, 0], sizes = [1, 128], strides = [1, 1]} : vector<18x128xf32> to vector<1x128xf32>
    %51 = vector.extract_strided_slice %1 {offsets = [0, 2], sizes = [8, 1], strides = [1, 1]} : vector<8x21xf32> to vector<8x1xf32>
    %52 = vector.broadcast %50 : vector<1x128xf32> to vector<8x128xf32>
    %53 = vector.broadcast %51 : vector<8x1xf32> to vector<8x128xf32>
    %54 = arith.subf %52, %53 : vector<8x128xf32>
    %55 = math.absf %54 : vector<8x128xf32>
    %56 = arith.addf %49, %55 : vector<8x128xf32>
    %57 = vector.extract_strided_slice %3 {offsets = [3, 0], sizes = [1, 128], strides = [1, 1]} : vector<18x128xf32> to vector<1x128xf32>
    %58 = vector.extract_strided_slice %1 {offsets = [0, 3], sizes = [8, 1], strides = [1, 1]} : vector<8x21xf32> to vector<8x1xf32>
    %59 = vector.broadcast %57 : vector<1x128xf32> to vector<8x128xf32>
    %60 = vector.broadcast %58 : vector<8x1xf32> to vector<8x128xf32>
    %61 = arith.subf %59, %60 : vector<8x128xf32>
    %62 = math.absf %61 : vector<8x128xf32>
    %63 = arith.addf %56, %62 : vector<8x128xf32>
    %64 = vector.extract_strided_slice %1 {offsets = [0, 18], sizes = [8, 1], strides = [1, 1]} : vector<8x21xf32> to vector<8x1xf32>
    %65 = vector.broadcast %64 : vector<8x1xf32> to vector<8x128xf32>
    %66 = arith.mulf %63, %65 : vector<8x128xf32>
    %67 = arith.addf %36, %66 : vector<8x128xf32>
    %68 = vector.extract_strided_slice %3 {offsets = [4, 0], sizes = [1, 128], strides = [1, 1]} : vector<18x128xf32> to vector<1x128xf32>
    %69 = vector.extract_strided_slice %1 {offsets = [0, 4], sizes = [8, 1], strides = [1, 1]} : vector<8x21xf32> to vector<8x1xf32>
    %70 = vector.broadcast %68 : vector<1x128xf32> to vector<8x128xf32>
    %71 = vector.broadcast %69 : vector<8x1xf32> to vector<8x128xf32>
    %72 = arith.subf %70, %71 : vector<8x128xf32>
    %73 = math.absf %72 : vector<8x128xf32>
    %74 = vector.extract_strided_slice %3 {offsets = [5, 0], sizes = [1, 128], strides = [1, 1]} : vector<18x128xf32> to vector<1x128xf32>
    %75 = vector.extract_strided_slice %1 {offsets = [0, 5], sizes = [8, 1], strides = [1, 1]} : vector<8x21xf32> to vector<8x1xf32>
    %76 = vector.broadcast %74 : vector<1x128xf32> to vector<8x128xf32>
    %77 = vector.broadcast %75 : vector<8x1xf32> to vector<8x128xf32>
    %78 = arith.subf %76, %77 : vector<8x128xf32>
    %79 = math.absf %78 : vector<8x128xf32>
    %80 = arith.addf %73, %79 : vector<8x128xf32>
    %81 = vector.extract_strided_slice %3 {offsets = [6, 0], sizes = [1, 128], strides = [1, 1]} : vector<18x128xf32> to vector<1x128xf32>
    %82 = vector.extract_strided_slice %1 {offsets = [0, 6], sizes = [8, 1], strides = [1, 1]} : vector<8x21xf32> to vector<8x1xf32>
    %83 = vector.broadcast %81 : vector<1x128xf32> to vector<8x128xf32>
    %84 = vector.broadcast %82 : vector<8x1xf32> to vector<8x128xf32>
    %85 = arith.subf %83, %84 : vector<8x128xf32>
    %86 = math.absf %85 : vector<8x128xf32>
    %87 = arith.addf %80, %86 : vector<8x128xf32>
    %88 = vector.extract_strided_slice %3 {offsets = [7, 0], sizes = [1, 128], strides = [1, 1]} : vector<18x128xf32> to vector<1x128xf32>
    %89 = vector.extract_strided_slice %1 {offsets = [0, 7], sizes = [8, 1], strides = [1, 1]} : vector<8x21xf32> to vector<8x1xf32>
    %90 = vector.broadcast %88 : vector<1x128xf32> to vector<8x128xf32>
    %91 = vector.broadcast %89 : vector<8x1xf32> to vector<8x128xf32>
    %92 = arith.subf %90, %91 : vector<8x128xf32>
    %93 = math.absf %92 : vector<8x128xf32>
    %94 = arith.addf %87, %93 : vector<8x128xf32>
    %95 = vector.extract_strided_slice %1 {offsets = [0, 19], sizes = [8, 1], strides = [1, 1]} : vector<8x21xf32> to vector<8x1xf32>
    %96 = vector.broadcast %95 : vector<8x1xf32> to vector<8x128xf32>
    %97 = arith.mulf %94, %96 : vector<8x128xf32>
    %98 = arith.addf %67, %97 : vector<8x128xf32>
    %99 = vector.extract_strided_slice %3 {offsets = [8, 0], sizes = [1, 128], strides = [1, 1]} : vector<18x128xf32> to vector<1x128xf32>
    %100 = vector.extract_strided_slice %1 {offsets = [0, 8], sizes = [8, 1], strides = [1, 1]} : vector<8x21xf32> to vector<8x1xf32>
    %101 = vector.broadcast %99 : vector<1x128xf32> to vector<8x128xf32>
    %102 = vector.broadcast %100 : vector<8x1xf32> to vector<8x128xf32>
    %103 = arith.subf %101, %102 : vector<8x128xf32>
    %104 = math.absf %103 : vector<8x128xf32>
    %105 = vector.extract_strided_slice %3 {offsets = [9, 0], sizes = [1, 128], strides = [1, 1]} : vector<18x128xf32> to vector<1x128xf32>
    %106 = vector.extract_strided_slice %1 {offsets = [0, 9], sizes = [8, 1], strides = [1, 1]} : vector<8x21xf32> to vector<8x1xf32>
    %107 = vector.broadcast %105 : vector<1x128xf32> to vector<8x128xf32>
    %108 = vector.broadcast %106 : vector<8x1xf32> to vector<8x128xf32>
    %109 = arith.subf %107, %108 : vector<8x128xf32>
    %110 = math.absf %109 : vector<8x128xf32>
    %111 = arith.addf %104, %110 : vector<8x128xf32>
    %112 = vector.extract_strided_slice %3 {offsets = [10, 0], sizes = [1, 128], strides = [1, 1]} : vector<18x128xf32> to vector<1x128xf32>
    %113 = vector.extract_strided_slice %1 {offsets = [0, 10], sizes = [8, 1], strides = [1, 1]} : vector<8x21xf32> to vector<8x1xf32>
    %114 = vector.broadcast %112 : vector<1x128xf32> to vector<8x128xf32>
    %115 = vector.broadcast %113 : vector<8x1xf32> to vector<8x128xf32>
    %116 = arith.subf %114, %115 : vector<8x128xf32>
    %117 = math.absf %116 : vector<8x128xf32>
    %118 = arith.addf %111, %117 : vector<8x128xf32>
    %119 = vector.extract_strided_slice %3 {offsets = [11, 0], sizes = [1, 128], strides = [1, 1]} : vector<18x128xf32> to vector<1x128xf32>
    %120 = vector.extract_strided_slice %1 {offsets = [0, 11], sizes = [8, 1], strides = [1, 1]} : vector<8x21xf32> to vector<8x1xf32>
    %121 = vector.broadcast %119 : vector<1x128xf32> to vector<8x128xf32>
    %122 = vector.broadcast %120 : vector<8x1xf32> to vector<8x128xf32>
    %123 = arith.subf %121, %122 : vector<8x128xf32>
    %124 = math.absf %123 : vector<8x128xf32>
    %125 = arith.addf %118, %124 : vector<8x128xf32>
    %126 = vector.extract_strided_slice %3 {offsets = [12, 0], sizes = [1, 128], strides = [1, 1]} : vector<18x128xf32> to vector<1x128xf32>
    %127 = vector.extract_strided_slice %1 {offsets = [0, 12], sizes = [8, 1], strides = [1, 1]} : vector<8x21xf32> to vector<8x1xf32>
    %128 = vector.broadcast %126 : vector<1x128xf32> to vector<8x128xf32>
    %129 = vector.broadcast %127 : vector<8x1xf32> to vector<8x128xf32>
    %130 = arith.subf %128, %129 : vector<8x128xf32>
    %131 = math.absf %130 : vector<8x128xf32>
    %132 = arith.addf %125, %131 : vector<8x128xf32>
    %133 = vector.extract_strided_slice %3 {offsets = [13, 0], sizes = [1, 128], strides = [1, 1]} : vector<18x128xf32> to vector<1x128xf32>
    %134 = vector.extract_strided_slice %1 {offsets = [0, 13], sizes = [8, 1], strides = [1, 1]} : vector<8x21xf32> to vector<8x1xf32>
    %135 = vector.broadcast %133 : vector<1x128xf32> to vector<8x128xf32>
    %136 = vector.broadcast %134 : vector<8x1xf32> to vector<8x128xf32>
    %137 = arith.subf %135, %136 : vector<8x128xf32>
    %138 = math.absf %137 : vector<8x128xf32>
    %139 = arith.addf %132, %138 : vector<8x128xf32>
    %140 = vector.extract_strided_slice %1 {offsets = [0, 20], sizes = [8, 1], strides = [1, 1]} : vector<8x21xf32> to vector<8x1xf32>
    %141 = vector.broadcast %140 : vector<8x1xf32> to vector<8x128xf32>
    %142 = arith.mulf %139, %141 : vector<8x128xf32>
    %143 = arith.addf %98, %142 : vector<8x128xf32>
    %c0_11 = arith.constant 0 : index
    %c0_12 = arith.constant 0 : index
    %c0_13 = arith.constant 0 : index
    %144 = vector.load %arg7[%c0_11, %c0_12, %c0_13] : memref<1x8x128xf32, #tpu.memory_space<vmem>>, vector<1x8x128xf32>
    %145 = vector.shape_cast %144 : vector<1x8x128xf32> to vector<8x128xf32>
    %146 = vector.shape_cast %143 : vector<8x128xf32> to vector<1x8x128xf32>
    tpu.vector_store %arg7[%c0_11, %c0_12, %c0_13], %146 {strides = array<i32>} : memref<1x8x128xf32, #tpu.memory_space<vmem>>, vector<1x8x128xf32>,
    return
  }
  func.func @transform_0(%arg0: i32, %arg1: i32, %arg2: i32) -> (i32, i32, i32) {
    %c0_i32 = arith.constant 0 : i32
    %c0_i32_0 = arith.constant 0 : i32
    return %arg0, %arg1, %c0_i32 : i32, i32, i32
  }
  func.func @transform_1(%arg0: i32, %arg1: i32, %arg2: i32) -> (i32, i32, i32) {
    %c0_i32 = arith.constant 0 : i32
    %c0_i32_0 = arith.constant 0 : i32
    return %arg0, %arg1, %c0_i32 : i32, i32, i32
  }
  func.func @transform_2(%arg0: i32, %arg1: i32, %arg2: i32) -> (i32, i32, i32) {
    %c0_i32 = arith.constant 0 : i32
    %c0_i32_0 = arith.constant 0 : i32
    return %arg0, %c0_i32, %arg2 : i32, i32, i32
  }
  func.func @transform_3(%arg0: i32, %arg1: i32, %arg2: i32) -> (i32, i32, i32) {
    %c0_i32 = arith.constant 0 : i32
    %c0_i32_0 = arith.constant 0 : i32
    return %arg0, %c0_i32, %arg2 : i32, i32, i32
  }
  func.func @transform_4(%arg0: i32, %arg1: i32, %arg2: i32) -> (i32, i32, i32) {
    %c0_i32 = arith.constant 0 : i32
    return %arg0, %arg1, %arg2 : i32, i32, i32
  }
}

</mosaic_0001>

<llo_original>
// kernel: tpu_custom_call.1
$region0: #{tpu_custom_call.1}
  #allocation0 [shape = 'u32[]', space=smem, size = 0x4, offset = 0x4, fixed_abs, tag = 'smem constant byte address 0x4 - core index']
  #allocation1 [shape = 'u32[144,128]{1,0:T(1,128)}', space=vmem, size = 0x12000, scoped, tag = 'internal scratch']
  %s0 = inlined_call_operand.vmem [shape: f32[2,8,21], index: 0, kind: input, shape index: {}]
  %s1 = inlined_call_operand.vmem [shape: f32[2,8,4], index: 1, kind: input, shape index: {}]
  %s2 = inlined_call_operand.vmem [shape: f32[2,18,128], index: 2, kind: input, shape index: {}]
  %s3 = inlined_call_operand.vmem [shape: f32[2,4,128], index: 3, kind: input, shape index: {}]
  %s4 = inlined_call_operand.hbm [shape: f32[2,8,128], index: 4, kind: output, shape index: {}]
  %s5 = sld [smem:[#allocation0]]
  $region49: #{tpu_custom_call.1} parent=0
    _
  %s7 = ssub.s32 1, %s5
  %s8 = scalar_select 0, %s7, %s5
  $region1: #{tpu_custom_call.1} parent=0
    #allocation2 [shape = 'u8[8192]{0}', space=vmem, size = 0x2000, scoped, tag = 'output window, operand 0']
    #allocation3 [shape = 's32[2]{0}', space=sflag, size = 0x8, scoped, tag = 'scoped memory for tpu_custom_call.1']
    %9 = vsyncpa [#allocation3], 0
    %s10 = scalar_lea.sflag [#allocation3], 1
    %11 = vsyncpa %s10, 0
    loop: start=0, step=1, limit=4
    $region2: #{tpu_custom_call.1} parent=1 // loop_pre_header
      _
    $region3: #{tpu_custom_call.1} parent=1 // loop_header
      %s13 = sphi 0, %s17
      %p14 = scmp.ge.s32.totalorder %s13, 4
      %s20 = sphi 0, %s39
      %s21 = sphi 0, %s35
      %s22 = sphi 0, %s31
      %s23 = sphi 0, %s20
      %s24 = sphi 0, %s21
      %s25 = sphi 0, %s22
      %s26 = sphi 0, %s23
      %s27 = sphi 0, %s24
      %s28 = sphi 0, %s25
      %s44 = sphi 0, %s46
      %s47 = sphi 0, %s44
      %s48 = sphi 0, %s47
      %s64 = sphi 0, %s48
      %s72 = sphi 0, %s74
      %s75 = sphi 0, %s72
      %s76 = sphi 0, %s75
      %s92 = sphi 0, %s76
      %s100 = sphi 0, %s102
      %s103 = sphi 0, %s100
      %s104 = sphi 0, %s103
      %s120 = sphi 0, %s104
      %s128 = sphi 0, %s130
      %s131 = sphi 0, %s128
      %s132 = sphi 0, %s131
      %s148 = sphi 0, %s132
      %s158 = sphi 0, %s160
      %s161 = sphi 0, %s158
      %s162 = sphi 0, %s161
      %s178 = sphi 0, %s162
    $region4: #{tpu_custom_call.1} parent=1 // loop_header_branch
      %16 = sbr.rel (%p14) target = $region8
    $region5: #{tpu_custom_call.1} parent=1 // loop_body
      %s18 = ssub.s32 %s13, 1
      %s19 = ssub.s32 %s13, 2
      %s29 = sadd.s32 1, %s22
      %p30 = scmp.ge.s32.totalorder %s29, 1
      %s31 = scalar_select %p30, 0, %s29
      %s32 = sadd.s32 1, %s21
      %s33 = scalar_select %p30, %s32, %s21
      %p34 = scmp.ge.s32.totalorder %s33, 1
      %s35 = scalar_select %p34, 0, %s33
      %s36 = sadd.s32 1, %s20
      %s37 = scalar_select %p34, %s36, %s20
      %p38 = scmp.ge.s32.totalorder %s37, 2
      %s39 = scalar_select %p38, 0, %s37
      %s40 = ssub.s32 %s20, %s39
      %s41 = ssub.s32 %s21, %s35
      %s42 = sor.u32 %s40, %s41
      %p43 = scmp.eq.s32.totalorder %s42, 0
      %s45 = sadd.s32 %s44, 1
      %s46 = scalar_select %p43, %s44, %s45
      %p49 = pneg %p43
      %p50 = scmp.eq.s32.totalorder %s13, 1
      %p51 = por %p49, %p50
      %p52 = scmp.ne.s32.totalorder %s44, %s47
      %p53 = scmp.eq.s32.totalorder %s13, 0
      %p54 = por %p52, %p53
      %p55 = scmp.ne.s32.totalorder %s44, %s47
      %p56 = scmp.eq.s32.totalorder %s18, 1
      %p57 = por %p55, %p56
      %p58 = scmp.ne.s32.totalorder %s47, %s48
      %p59 = scmp.eq.s32.totalorder %s18, 0
      %p60 = por %p58, %p59
      %p61 = scmp.ne.s32.totalorder %s47, %s48
      %p62 = scmp.eq.s32.totalorder %s19, 1
      %p63 = por %p61, %p62
      %p65 = scmp.ne.s32.totalorder %s48, %s64
      %p66 = scmp.eq.s32.totalorder %s19, 0
      %p67 = por %p65, %p66
      %s68 = ssub.s32 %s20, %s39
      %s69 = ssub.s32 %s21, %s35
      %s70 = sor.u32 %s68, %s69
      %p71 = scmp.eq.s32.totalorder %s70, 0
      %s73 = sadd.s32 %s72, 1
      %s74 = scalar_select %p71, %s72, %s73
      %p77 = pneg %p71
      %p78 = scmp.eq.s32.totalorder %s13, 1
      %p79 = por %p77, %p78
      %p80 = scmp.ne.s32.totalorder %s72, %s75
      %p81 = scmp.eq.s32.totalorder %s13, 0
      %p82 = por %p80, %p81
      %p83 = scmp.ne.s32.totalorder %s72, %s75
      %p84 = scmp.eq.s32.totalorder %s18, 1
      %p85 = por %p83, %p84
      %p86 = scmp.ne.s32.totalorder %s75, %s76
      %p87 = scmp.eq.s32.totalorder %s18, 0
      %p88 = por %p86, %p87
      %p89 = scmp.ne.s32.totalorder %s75, %s76
      %p90 = scmp.eq.s32.totalorder %s19, 1
      %p91 = por %p89, %p90
      %p93 = scmp.ne.s32.totalorder %s76, %s92
      %p94 = scmp.eq.s32.totalorder %s19, 0
      %p95 = por %p93, %p94
      %s96 = ssub.s32 %s20, %s39
      %s97 = ssub.s32 %s22, %s31
      %s98 = sor.u32 %s96, %s97
      %p99 = scmp.eq.s32.totalorder %s98, 0
      %s101 = sadd.s32 %s100, 1
      %s102 = scalar_select %p99, %s100, %s101
      %p105 = pneg %p99
      %p106 = scmp.eq.s32.totalorder %s13, 1
      %p107 = por %p105, %p106
      %p108 = scmp.ne.s32.totalorder %s100, %s103
      %p109 = scmp.eq.s32.totalorder %s13, 0
      %p110 = por %p108, %p109
      %p111 = scmp.ne.s32.totalorder %s100, %s103
      %p112 = scmp.eq.s32.totalorder %s18, 1
      %p113 = por %p111, %p112
      %p114 = scmp.ne.s32.totalorder %s103, %s104
      %p115 = scmp.eq.s32.totalorder %s18, 0
      %p116 = por %p114, %p115
      %p117 = scmp.ne.s32.totalorder %s103, %s104
      %p118 = scmp.eq.s32.totalorder %s19, 1
      %p119 = por %p117, %p118
      %p121 = scmp.ne.s32.totalorder %s104, %s120
      %p122 = scmp.eq.s32.totalorder %s19, 0
      %p123 = por %p121, %p122
      %s124 = ssub.s32 %s20, %s39
      %s125 = ssub.s32 %s22, %s31
      %s126 = sor.u32 %s124, %s125
      %p127 = scmp.eq.s32.totalorder %s126, 0
      %s129 = sadd.s32 %s128, 1
      %s130 = scalar_select %p127, %s128, %s129
      %p133 = pneg %p127
      %p134 = scmp.eq.s32.totalorder %s13, 1
      %p135 = por %p133, %p134
      %p136 = scmp.ne.s32.totalorder %s128, %s131
      %p137 = scmp.eq.s32.totalorder %s13, 0
      %p138 = por %p136, %p137
      %p139 = scmp.ne.s32.totalorder %s128, %s131
      %p140 = scmp.eq.s32.totalorder %s18, 1
      %p141 = por %p139, %p140
      %p142 = scmp.ne.s32.totalorder %s131, %s132
      %p143 = scmp.eq.s32.totalorder %s18, 0
      %p144 = por %p142, %p143
      %p145 = scmp.ne.s32.totalorder %s131, %s132
      %p146 = scmp.eq.s32.totalorder %s19, 1
      %p147 = por %p145, %p146
      %p149 = scmp.ne.s32.totalorder %s132, %s148
      %p150 = scmp.eq.s32.totalorder %s19, 0
      %p151 = por %p149, %p150
      %s152 = ssub.s32 %s20, %s39
      %s153 = ssub.s32 %s21, %s35
      %s154 = sor.u32 %s152, %s153
      %s155 = ssub.s32 %s22, %s31
      %s156 = sor.u32 %s154, %s155
      %p157 = scmp.eq.s32.totalorder %s156, 0
      %s159 = sadd.s32 %s158, 1
      %s160 = scalar_select %p157, %s158, %s159
      %p163 = pneg %p157
      %p164 = scmp.eq.s32.totalorder %s13, 1
      %p165 = por %p163, %p164
      %p166 = scmp.ne.s32.totalorder %s158, %s161
      %p167 = scmp.eq.s32.totalorder %s13, 0
      %p168 = por %p166, %p167
      %p169 = scmp.ne.s32.totalorder %s158, %s161
      %p170 = scmp.eq.s32.totalorder %s18, 1
      %p171 = por %p169, %p170
      %p172 = scmp.ne.s32.totalorder %s161, %s162
      %p173 = scmp.eq.s32.totalorder %s18, 0
      %p174 = por %p172, %p173
      %p175 = scmp.ne.s32.totalorder %s161, %s162
      %p176 = scmp.eq.s32.totalorder %s19, 1
      %p177 = por %p175, %p176
      %p179 = scmp.ne.s32.totalorder %s162, %s178
      %p180 = scmp.eq.s32.totalorder %s19, 0
      %p181 = por %p179, %p180
      %p182 = scmp.le.s32.totalorder 1, %s13
      %p183 = scmp.lt.s32.totalorder %s13, 3
      %p184 = pnand %p182, %p183
      %p185 = pneg %p184
      // Predicated region
      $region9: #{tpu_custom_call.1} parent=5 // pred_check
        _
      $region10: #{tpu_custom_call.1} parent=5 // pred_check_branch
        %187 = sbr.rel (%p184) target = $region12
      $region11: #{tpu_custom_call.1} parent=5 // pred_region
        %s188 = ssub.s32 %s13, 1
      $region12: #{tpu_custom_call.1} parent=5 // pred_fallthru
        _
      %p189 = scmp.lt.s32.totalorder %s13, 2
      // Predicated region
      $region13: #{tpu_custom_call.1} parent=5 // pred_check
        %p190 = pneg %p189
      $region14: #{tpu_custom_call.1} parent=5 // pred_check_branch
        %192 = sbr.rel (%p190) target = $region16
      $region15: #{tpu_custom_call.1} parent=5 // pred_region
        // Predicated region
        $region17: #{tpu_custom_call.1} parent=15 // pred_check
          %p193 = pneg %p54
        $region18: #{tpu_custom_call.1} parent=15 // pred_check_branch
          %195 = sbr.rel (%p193) target = $region20
        $region19: #{tpu_custom_call.1} parent=15 // pred_region
          %p196 = scmp.lt.s32.totalorder %s20, 1
          %s197 = scalar_select %p196, %s20, 1
          %p198 = scmp.lt.s32.totalorder %s21, 0
          %s199 = scalar_select %p198, %s21, 0
          %s200 = sadd.s32 %s199, %s197
          %s201 = smul.addr %s200, 8
          %s202 = scalar_lea.vmem %s0, %s201
        $region20: #{tpu_custom_call.1} parent=15 // pred_fallthru
          _
        // Predicated region
        $region21: #{tpu_custom_call.1} parent=15 // pred_check
          %p203 = pneg %p82
        $region22: #{tpu_custom_call.1} parent=15 // pred_check_branch
          %205 = sbr.rel (%p203) target = $region24
        $region23: #{tpu_custom_call.1} parent=15 // pred_region
          %p206 = scmp.lt.s32.totalorder %s20, 1
          %s207 = scalar_select %p206, %s20, 1
          %p208 = scmp.lt.s32.totalorder %s21, 0
          %s209 = scalar_select %p208, %s21, 0
          %s210 = sadd.s32 %s209, %s207
          %s211 = smul.addr %s210, 8
          %s212 = scalar_lea.vmem %s1, %s211
        $region24: #{tpu_custom_call.1} parent=15 // pred_fallthru
          _
        // Predicated region
        $region25: #{tpu_custom_call.1} parent=15 // pred_check
          %p213 = pneg %p110
        $region26: #{tpu_custom_call.1} parent=15 // pred_check_branch
          %215 = sbr.rel (%p213) target = $region28
        $region27: #{tpu_custom_call.1} parent=15 // pred_region
          %p216 = scmp.lt.s32.totalorder %s20, 1
          %s217 = scalar_select %p216, %s20, 1
          %p218 = scmp.lt.s32.totalorder %s22, 0
          %s219 = scalar_select %p218, %s22, 0
          %s220 = smul.addr %s217, 3
          %s221 = sadd.s32 %s219, %s220
          %s222 = smul.addr %s221, 8
          %s223 = scalar_lea.vmem %s2, %s222
        $region28: #{tpu_custom_call.1} parent=15 // pred_fallthru
          _
        // Predicated region
        $region29: #{tpu_custom_call.1} parent=15 // pred_check
          %p224 = pneg %p138
        $region30: #{tpu_custom_call.1} parent=15 // pred_check_branch
          %226 = sbr.rel (%p224) target = $region32
        $region31: #{tpu_custom_call.1} parent=15 // pred_region
          %p227 = scmp.lt.s32.totalorder %s20, 1
          %s228 = scalar_select %p227, %s20, 1
          %p229 = scmp.lt.s32.totalorder %s22, 0
          %s230 = scalar_select %p229, %s22, 0
          %s231 = sadd.s32 %s230, %s228
          %s232 = smul.addr %s231, 4
          %s233 = scalar_lea.vmem %s3, %s232
        $region32: #{tpu_custom_call.1} parent=15 // pred_fallthru
          _
      $region16: #{tpu_custom_call.1} parent=5 // pred_fallthru
        _
      %p234 = scmp.le.s32.totalorder 1, %s13
      %p235 = scmp.lt.s32.totalorder %s13, 3
      %p236 = pnand %p234, %p235
      %p237 = pneg %p236
      // Predicated region
      $region33: #{tpu_custom_call.1} parent=5 // pred_check
        _
      $region34: #{tpu_custom_call.1} parent=5 // pred_check_branch
        %239 = sbr.rel (%p236) target = $region36
      $region35: #{tpu_custom_call.1} parent=5 // pred_region
        %s240 = ssub.s32 %s13, 1
        %p241 = scmp.lt.s32.totalorder %s23, 1
        %s242 = scalar_select %p241, %s23, 1
        %p243 = scmp.lt.s32.totalorder %s24, 0
        %s244 = scalar_select %p243, %s24, 0
        %s245 = sadd.s32 %s244, %s242
        %s246 = smul.addr %s245, 8
        %s247 = scalar_lea.vmem %s0, %s246
        %p248 = pneg %p60
        %p249 = pneg %p57
        %p250 = scmp.lt.s32.totalorder %s23, 1
        %s251 = scalar_select %p250, %s23, 1
        %p252 = scmp.lt.s32.totalorder %s24, 0
        %s253 = scalar_select %p252, %s24, 0
        %s254 = sadd.s32 %s253, %s251
        %s255 = smul.addr %s254, 8
        %s256 = scalar_lea.vmem %s1, %s255
        %p257 = pneg %p88
        %p258 = pneg %p85
        %p259 = scmp.lt.s32.totalorder %s23, 1
        %s260 = scalar_select %p259, %s23, 1
        %p261 = scmp.lt.s32.totalorder %s25, 0
        %s262 = scalar_select %p261, %s25, 0
        %s263 = smul.addr %s260, 3
        %s264 = sadd.s32 %s262, %s263
        %s265 = smul.addr %s264, 8
        %s266 = scalar_lea.vmem %s2, %s265
        %p267 = pneg %p116
        %p268 = pneg %p113
        %p269 = scmp.lt.s32.totalorder %s23, 1
        %s270 = scalar_select %p269, %s23, 1
        %p271 = scmp.lt.s32.totalorder %s25, 0
        %s272 = scalar_select %p271, %s25, 0
        %s273 = sadd.s32 %s272, %s270
        %s274 = smul.addr %s273, 4
        %s275 = scalar_lea.vmem %s3, %s274
        %p276 = pneg %p144
        %p277 = pneg %p141
        %p278 = pneg %p174
        %p279 = pneg %p171
        %s280 = sand.u32 %s161, 1
        %s281 = scalar_lea.sflag [#allocation3], %s280
        %s282 = sand.u32 %s161, 1
        %s283 = smul.addr %s282, 8
        %s284 = scalar_lea.vmem [#allocation2], %s283
        %p285 = scmp.lt.s32.totalorder %s23, 1
        %s286 = scalar_select %p285, %s23, 1
        %p287 = scmp.lt.s32.totalorder %s24, 0
        %s288 = scalar_select %p287, %s24, 0
        %s289 = sadd.s32 %s288, %s286
        %s290 = smul.addr %s289, 8
        %s291 = scalar_lea.vmem %s0, %s290
        %p292 = scmp.lt.s32.totalorder %s23, 1
        %s293 = scalar_select %p292, %s23, 1
        %p294 = scmp.lt.s32.totalorder %s24, 0
        %s295 = scalar_select %p294, %s24, 0
        %s296 = sadd.s32 %s295, %s293
        %s297 = smul.addr %s296, 8
        %s298 = scalar_lea.vmem %s1, %s297
        %p299 = scmp.lt.s32.totalorder %s23, 1
        %s300 = scalar_select %p299, %s23, 1
        %p301 = scmp.lt.s32.totalorder %s25, 0
        %s302 = scalar_select %p301, %s25, 0
        %s303 = smul.addr %s300, 3
        %s304 = sadd.s32 %s302, %s303
        %s305 = smul.addr %s304, 8
        %s306 = scalar_lea.vmem %s2, %s305
        %p307 = scmp.lt.s32.totalorder %s23, 1
        %s308 = scalar_select %p307, %s23, 1
        %p309 = scmp.lt.s32.totalorder %s25, 0
        %s310 = scalar_select %p309, %s25, 0
        %s311 = sadd.s32 %s310, %s308
        %s312 = smul.addr %s311, 4
        %s313 = scalar_lea.vmem %s3, %s312
        %v314 = vld [vmem:[%s291] sm:$0xff]
        %v315 = vld [vmem:[%s306] sm:$0xff]
        %v316 = vld [vmem:[%s306 + $0x8] sm:$0xff]
        %v317 = vld [vmem:[%s306 + $0x10] sm:$0x3]
        %v318 = vld [vmem:[%s298] sm:$0xff]
        %v319 = vld [vmem:[%s313] sm:$0xf]
        %v320 = vlaneseq
        %v321 = vshrl.u32 %v320, 7
        %v322 = vsub.s32 6, %v321
        %v323 = vrot.slane %v316, %v322
        %325 = vset.pattern.permute.xlu0 14
        %326 = vperm.xlu0 %325, %v314
        %v327 = vpop.permute.xlu0 %326
        %v329 = vsub.f32 %v323, %v327
        %v330 = vand.u32 2147483647, %v329
        %v331 = vlaneseq
        %v332 = vshrl.u32 %v331, 7
        %v333 = vsub.s32 7, %v332
        %v334 = vrot.slane %v316, %v333
        %335 = vset.pattern.permute.xlu0 15
        %336 = vperm.xlu0 %335, %v314
        %v337 = vpop.permute.xlu0 %336
        %v339 = vsub.f32 %v334, %v337
        %v340 = vand.u32 2147483647, %v339
        %v341 = vadd.f32 %v330, %v340
        %v342 = vlaneseq
        %v343 = vshrl.u32 %v342, 7
        %v344 = vsub.s32 0, %v343
        %v345 = vrot.slane %v317, %v344
        %346 = vset.pattern.permute.xlu0 16
        %347 = vperm.xlu0 %346, %v314
        %v348 = vpop.permute.xlu0 %347
        %v350 = vsub.f32 %v345, %v348
        %v351 = vand.u32 2147483647, %v350
        %v352 = vadd.f32 %v341, %v351
        %v353 = vlaneseq
        %v354 = vshrl.u32 %v353, 7
        %v355 = vsub.s32 1, %v354
        %v356 = vrot.slane %v317, %v355
        %357 = vset.pattern.permute.xlu0 17
        %358 = vperm.xlu0 %357, %v314
        %v359 = vpop.permute.xlu0 %358
        %v361 = vsub.f32 %v356, %v359
        %v362 = vand.u32 2147483647, %v361
        %v363 = vadd.f32 %v352, %v362
        %vm364 = vcmask 31744
        %v366 = vsel %vm364, %v318, 0
        %vm368 = vcmask 1043456
        %v370 = vsel %vm368, %v319, 0
        %372 = vmatprep.subr.mxu0 0.0
        %373 = vmatpush1.msra.mxu0 0.0
        %374 = vmatprep.subr.mxu0 0.0
        %375 = vmatpush1.msra.mxu0 0.0
        %376 = vmatprep.subr.mxu0 0.0
        %377 = vmatpush1.msra.mxu0 0.0
        %378 = vmatprep.subr.mxu0 0.0
        %379 = vmatpush1.msra.mxu0 0.0
        %380 = vmatprep.subr.mxu0 0.0
        %381 = vmatpush1.msra.mxu0 0.0
        %382 = vmatprep.subr.mxu0 0.0
        %383 = vmatpush1.msra.mxu0 0.0
        %384 = vmatprep.subr.mxu0 0.0
        %385 = vmatpush1.msra.mxu0 0.0
        %386 = vmatprep.subr.mxu0 0.0
        %387 = vmatpush1.msra.mxu0 0.0
        %388 = vmatprep.subr.mxu0 0.0
        %389 = vmatpush1.msra.mxu0 0.0
        %390 = vmatprep.subr.mxu0 0.0
        %391 = vmatpush1.msra.mxu0 0.0
        %392 = vmatprep.subr.mxu0 0.0
        %393 = vmatpush1.msra.mxu0 0.0
        %394 = vmatprep.subr.mxu0 0.0
        %395 = vmatpush1.msra.mxu0 0.0
        %396 = vmatprep.subr.mxu0 0.0
        %397 = vmatpush1.msra.mxu0 0.0
        %398 = vmatprep.subr.mxu0 0.0
        %399 = vmatpush1.msra.mxu0 0.0
        %400 = vmatprep.subr.mxu0 0.0
        %401 = vmatpush1.msra.mxu0 0.0
        %402 = vmatprep.subr.mxu0 0.0
        %v403 = vand.u32 %v370, 4294901760
        %404 = vmatpush1.msra.mxu0 %v403
        %405 = vmatprep.subr.mxu0 0.0
        %406 = vmatpush2.msra.mxu0 0.0
        %407 = vmatprep.subr.mxu0 0.0
        %408 = vmatpush2.msra.mxu0 0.0
        %409 = vmatprep.subr.mxu0 0.0
        %410 = vmatpush2.msra.mxu0 0.0
        %411 = vmatprep.subr.mxu0 0.0
        %412 = vmatpush2.msra.mxu0 0.0
        %413 = vmatprep.subr.mxu0 0.0
        %414 = vmatpush2.msra.mxu0 0.0
        %415 = vmatprep.subr.mxu0 0.0
        %416 = vmatpush2.msra.mxu0 0.0
        %417 = vmatprep.subr.mxu0 0.0
        %418 = vmatpush2.msra.mxu0 0.0
        %419 = vmatprep.subr.mxu0 0.0
        %420 = vmatpush2.msra.mxu0 0.0
        %421 = vmatprep.subr.mxu0 0.0
        %422 = vmatpush2.msra.mxu0 0.0
        %423 = vmatprep.subr.mxu0 0.0
        %424 = vmatpush2.msra.mxu0 0.0
        %425 = vmatprep.subr.mxu0 0.0
        %426 = vmatpush2.msra.mxu0 0.0
        %427 = vmatprep.subr.mxu0 0.0
        %428 = vmatpush2.msra.mxu0 0.0
        %429 = vmatprep.subr.mxu0 0.0
        %430 = vmatpush2.msra.mxu0 0.0
        %431 = vmatprep.subr.mxu0 0.0
        %432 = vmatpush2.msra.mxu0 0.0
        %433 = vmatprep.subr.mxu0 0.0
        %434 = vmatpush2.msra.mxu0 0.0
        %435 = vmatprep.subr.mxu0 0.0
        %436 = vmatpush2.msra.mxu0 0.0
        %437 = vmatprep.mubr.f32.mxu0 0.0
        %v438 = vand.u32 %v366, 4294901760
        %v439 = vsub.f32 %v366, %v438
        %v440 = vand.u32 %v439, 4294901760
        %v441 = vsub.f32 %v439, %v440
        %v442 = vand.u32 %v441, 4294901760
        %443 = vmatmul.mubr.f32.gmra.mxu0 %v442
        %v444 = vpop.f32.mrf.mxu0
        %v445 = vadd.f32 %v363, %v444
        %v446 = vpop.f32.mrf.mxu0
        %447 = vdwg.mxu0
        %448 = vmatprep.subr.mxu0 0.0
        %449 = vmatpush1.msra.mxu0 0.0
        %450 = vmatprep.subr.mxu0 0.0
        %451 = vmatpush1.msra.mxu0 0.0
        %452 = vmatprep.subr.mxu0 0.0
        %453 = vmatpush1.msra.mxu0 0.0
        %454 = vmatprep.subr.mxu0 0.0
        %455 = vmatpush1.msra.mxu0 0.0
        %456 = vmatprep.subr.mxu0 0.0
        %457 = vmatpush1.msra.mxu0 0.0
        %458 = vmatprep.subr.mxu0 0.0
        %459 = vmatpush1.msra.mxu0 0.0
        %460 = vmatprep.subr.mxu0 0.0
        %461 = vmatpush1.msra.mxu0 0.0
        %462 = vmatprep.subr.mxu0 0.0
        %463 = vmatpush1.msra.mxu0 0.0
        %464 = vmatprep.subr.mxu0 0.0
        %465 = vmatpush1.msra.mxu0 0.0
        %466 = vmatprep.subr.mxu0 0.0
        %467 = vmatpush1.msra.mxu0 0.0
        %468 = vmatprep.subr.mxu0 0.0
        %469 = vmatpush1.msra.mxu0 0.0
        %470 = vmatprep.subr.mxu0 0.0
        %471 = vmatpush1.msra.mxu0 0.0
        %472 = vmatprep.subr.mxu0 0.0
        %473 = vmatpush1.msra.mxu0 0.0
        %474 = vmatprep.subr.mxu0 0.0
        %475 = vmatpush1.msra.mxu0 0.0
        %476 = vmatprep.subr.mxu0 0.0
        %477 = vmatpush1.msra.mxu0 0.0
        %478 = vmatprep.subr.mxu0 0.0
        %v479 = vand.u32 %v370, 4294901760
        %v480 = vsub.f32 %v370, %v479
        %v481 = vand.u32 %v480, 4294901760
        %v482 = vsub.f32 %v480, %v481
        %v483 = vand.u32 %v482, 4294901760
        %484 = vmatpush1.msra.mxu0 %v483
        %485 = vmatprep.subr.mxu0 0.0
        %486 = vmatpush2.msra.mxu0 0.0
        %487 = vmatprep.subr.mxu0 0.0
        %488 = vmatpush2.msra.mxu0 0.0
        %489 = vmatprep.subr.mxu0 0.0
        %490 = vmatpush2.msra.mxu0 0.0
        %491 = vmatprep.subr.mxu0 0.0
        %492 = vmatpush2.msra.mxu0 0.0
        %493 = vmatprep.subr.mxu0 0.0
        %494 = vmatpush2.msra.mxu0 0.0
        %495 = vmatprep.subr.mxu0 0.0
        %496 = vmatpush2.msra.mxu0 0.0
        %497 = vmatprep.subr.mxu0 0.0
        %498 = vmatpush2.msra.mxu0 0.0
        %499 = vmatprep.subr.mxu0 0.0
        %500 = vmatpush2.msra.mxu0 0.0
        %501 = vmatprep.subr.mxu0 0.0
        %502 = vmatpush2.msra.mxu0 0.0
        %503 = vmatprep.subr.mxu0 0.0
        %504 = vmatpush2.msra.mxu0 0.0
        %505 = vmatprep.subr.mxu0 0.0
        %506 = vmatpush2.msra.mxu0 0.0
        %507 = vmatprep.subr.mxu0 0.0
        %508 = vmatpush2.msra.mxu0 0.0
        %509 = vmatprep.subr.mxu0 0.0
        %510 = vmatpush2.msra.mxu0 0.0
        %511 = vmatprep.subr.mxu0 0.0
        %512 = vmatpush2.msra.mxu0 0.0
        %513 = vmatprep.subr.mxu0 0.0
        %514 = vmatpush2.msra.mxu0 0.0
        %515 = vmatprep.subr.mxu0 0.0
        %516 = vmatpush2.msra.mxu0 0.0
        %517 = vmatprep.mubr.f32.mxu0 0.0
        %v518 = vand.u32 %v366, 4294901760
        %519 = vmatmul.mubr.f32.gmra.mxu0 %v518
        %v520 = vpop.f32.mrf.mxu0
        %v521 = vadd.f32 %v445, %v520
        %v522 = vpop.f32.mrf.mxu0
        %523 = vdwg.mxu0
        %524 = vmatprep.subr.mxu0 0.0
        %525 = vmatpush1.msra.mxu0 0.0
        %526 = vmatprep.subr.mxu0 0.0
        %527 = vmatpush1.msra.mxu0 0.0
        %528 = vmatprep.subr.mxu0 0.0
        %529 = vmatpush1.msra.mxu0 0.0
        %530 = vmatprep.subr.mxu0 0.0
        %531 = vmatpush1.msra.mxu0 0.0
        %532 = vmatprep.subr.mxu0 0.0
        %533 = vmatpush1.msra.mxu0 0.0
        %534 = vmatprep.subr.mxu0 0.0
        %535 = vmatpush1.msra.mxu0 0.0
        %536 = vmatprep.subr.mxu0 0.0
        %537 = vmatpush1.msra.mxu0 0.0
        %538 = vmatprep.subr.mxu0 0.0
        %539 = vmatpush1.msra.mxu0 0.0
        %540 = vmatprep.subr.mxu0 0.0
        %541 = vmatpush1.msra.mxu0 0.0
        %542 = vmatprep.subr.mxu0 0.0
        %543 = vmatpush1.msra.mxu0 0.0
        %544 = vmatprep.subr.mxu0 0.0
        %545 = vmatpush1.msra.mxu0 0.0
        %546 = vmatprep.subr.mxu0 0.0
        %547 = vmatpush1.msra.mxu0 0.0
        %548 = vmatprep.subr.mxu0 0.0
        %549 = vmatpush1.msra.mxu0 0.0
        %550 = vmatprep.subr.mxu0 0.0
        %551 = vmatpush1.msra.mxu0 0.0
        %552 = vmatprep.subr.mxu0 0.0
        %553 = vmatpush1.msra.mxu0 0.0
        %554 = vmatprep.subr.mxu0 0.0
        %v555 = vand.u32 %v370, 4294901760
        %v556 = vsub.f32 %v370, %v555
        %557 = vmatpush1.msra.mxu0 %v556
        %558 = vmatprep.subr.mxu0 0.0
        %559 = vmatpush2.msra.mxu0 0.0
        %560 = vmatprep.subr.mxu0 0.0
        %561 = vmatpush2.msra.mxu0 0.0
        %562 = vmatprep.subr.mxu0 0.0
        %563 = vmatpush2.msra.mxu0 0.0
        %564 = vmatprep.subr.mxu0 0.0
        %565 = vmatpush2.msra.mxu0 0.0
        %566 = vmatprep.subr.mxu0 0.0
        %567 = vmatpush2.msra.mxu0 0.0
        %568 = vmatprep.subr.mxu0 0.0
        %569 = vmatpush2.msra.mxu0 0.0
        %570 = vmatprep.subr.mxu0 0.0
        %571 = vmatpush2.msra.mxu0 0.0
        %572 = vmatprep.subr.mxu0 0.0
        %573 = vmatpush2.msra.mxu0 0.0
        %574 = vmatprep.subr.mxu0 0.0
        %575 = vmatpush2.msra.mxu0 0.0
        %576 = vmatprep.subr.mxu0 0.0
        %577 = vmatpush2.msra.mxu0 0.0
        %578 = vmatprep.subr.mxu0 0.0
        %579 = vmatpush2.msra.mxu0 0.0
        %580 = vmatprep.subr.mxu0 0.0
        %581 = vmatpush2.msra.mxu0 0.0
        %582 = vmatprep.subr.mxu0 0.0
        %583 = vmatpush2.msra.mxu0 0.0
        %584 = vmatprep.subr.mxu0 0.0
        %585 = vmatpush2.msra.mxu0 0.0
        %586 = vmatprep.subr.mxu0 0.0
        %587 = vmatpush2.msra.mxu0 0.0
        %588 = vmatprep.subr.mxu0 0.0
        %589 = vmatpush2.msra.mxu0 0.0
        %590 = vmatprep.mubr.f32.mxu0 0.0
        %v591 = vand.u32 %v366, 4294901760
        %v592 = vsub.f32 %v366, %v591
        %593 = vmatmul.mubr.f32.gmra.mxu0 %v592
        %v594 = vpop.f32.mrf.mxu0
        %v595 = vadd.f32 %v521, %v594
        %v596 = vpop.f32.mrf.mxu0
        %597 = vdwg.mxu0
        %598 = vmatprep.subr.mxu0 0.0
        %599 = vmatpush1.msra.mxu0 0.0
        %600 = vmatprep.subr.mxu0 0.0
        %601 = vmatpush1.msra.mxu0 0.0
        %602 = vmatprep.subr.mxu0 0.0
        %603 = vmatpush1.msra.mxu0 0.0
        %604 = vmatprep.subr.mxu0 0.0
        %605 = vmatpush1.msra.mxu0 0.0
        %606 = vmatprep.subr.mxu0 0.0
        %607 = vmatpush1.msra.mxu0 0.0
        %608 = vmatprep.subr.mxu0 0.0
        %609 = vmatpush1.msra.mxu0 0.0
        %610 = vmatprep.subr.mxu0 0.0
        %611 = vmatpush1.msra.mxu0 0.0
        %612 = vmatprep.subr.mxu0 0.0
        %613 = vmatpush1.msra.mxu0 0.0
        %614 = vmatprep.subr.mxu0 0.0
        %615 = vmatpush1.msra.mxu0 0.0
        %616 = vmatprep.subr.mxu0 0.0
        %617 = vmatpush1.msra.mxu0 0.0
        %618 = vmatprep.subr.mxu0 0.0
        %619 = vmatpush1.msra.mxu0 0.0
        %620 = vmatprep.subr.mxu0 0.0
        %621 = vmatpush1.msra.mxu0 0.0
        %622 = vmatprep.subr.mxu0 0.0
        %623 = vmatpush1.msra.mxu0 0.0
        %624 = vmatprep.subr.mxu0 0.0
        %625 = vmatpush1.msra.mxu0 0.0
        %626 = vmatprep.subr.mxu0 0.0
        %627 = vmatpush1.msra.mxu0 0.0
        %628 = vmatprep.subr.mxu0 0.0
        %v629 = vand.u32 %v370, 4294901760
        %630 = vmatpush1.msra.mxu0 %v629
        %631 = vmatprep.subr.mxu0 0.0
        %632 = vmatpush2.msra.mxu0 0.0
        %633 = vmatprep.subr.mxu0 0.0
        %634 = vmatpush2.msra.mxu0 0.0
        %635 = vmatprep.subr.mxu0 0.0
        %636 = vmatpush2.msra.mxu0 0.0
        %637 = vmatprep.subr.mxu0 0.0
        %638 = vmatpush2.msra.mxu0 0.0
        %639 = vmatprep.subr.mxu0 0.0
        %640 = vmatpush2.msra.mxu0 0.0
        %641 = vmatprep.subr.mxu0 0.0
        %642 = vmatpush2.msra.mxu0 0.0
        %643 = vmatprep.subr.mxu0 0.0
        %644 = vmatpush2.msra.mxu0 0.0
        %645 = vmatprep.subr.mxu0 0.0
        %646 = vmatpush2.msra.mxu0 0.0
        %647 = vmatprep.subr.mxu0 0.0
        %648 = vmatpush2.msra.mxu0 0.0
        %649 = vmatprep.subr.mxu0 0.0
        %650 = vmatpush2.msra.mxu0 0.0
        %651 = vmatprep.subr.mxu0 0.0
        %652 = vmatpush2.msra.mxu0 0.0
        %653 = vmatprep.subr.mxu0 0.0
        %654 = vmatpush2.msra.mxu0 0.0
        %655 = vmatprep.subr.mxu0 0.0
        %656 = vmatpush2.msra.mxu0 0.0
        %657 = vmatprep.subr.mxu0 0.0
        %658 = vmatpush2.msra.mxu0 0.0
        %659 = vmatprep.subr.mxu0 0.0
        %660 = vmatpush2.msra.mxu0 0.0
        %661 = vmatprep.subr.mxu0 0.0
        %662 = vmatpush2.msra.mxu0 0.0
        %663 = vmatprep.mubr.f32.mxu0 0.0
        %v664 = vand.u32 %v366, 4294901760
        %v665 = vsub.f32 %v366, %v664
        %v666 = vand.u32 %v665, 4294901760
        %667 = vmatmul.mubr.f32.gmra.mxu0 %v666
        %v668 = vpop.f32.mrf.mxu0
        %v669 = vadd.f32 %v595, %v668
        %v670 = vpop.f32.mrf.mxu0
        %671 = vdwg.mxu0
        %672 = vmatprep.subr.mxu0 0.0
        %673 = vmatpush1.msra.mxu0 0.0
        %674 = vmatprep.subr.mxu0 0.0
        %675 = vmatpush1.msra.mxu0 0.0
        %676 = vmatprep.subr.mxu0 0.0
        %677 = vmatpush1.msra.mxu0 0.0
        %678 = vmatprep.subr.mxu0 0.0
        %679 = vmatpush1.msra.mxu0 0.0
        %680 = vmatprep.subr.mxu0 0.0
        %681 = vmatpush1.msra.mxu0 0.0
        %682 = vmatprep.subr.mxu0 0.0
        %683 = vmatpush1.msra.mxu0 0.0
        %684 = vmatprep.subr.mxu0 0.0
        %685 = vmatpush1.msra.mxu0 0.0
        %686 = vmatprep.subr.mxu0 0.0
        %687 = vmatpush1.msra.mxu0 0.0
        %688 = vmatprep.subr.mxu0 0.0
        %689 = vmatpush1.msra.mxu0 0.0
        %690 = vmatprep.subr.mxu0 0.0
        %691 = vmatpush1.msra.mxu0 0.0
        %692 = vmatprep.subr.mxu0 0.0
        %693 = vmatpush1.msra.mxu0 0.0
        %694 = vmatprep.subr.mxu0 0.0
        %695 = vmatpush1.msra.mxu0 0.0
        %696 = vmatprep.subr.mxu0 0.0
        %697 = vmatpush1.msra.mxu0 0.0
        %698 = vmatprep.subr.mxu0 0.0
        %699 = vmatpush1.msra.mxu0 0.0
        %700 = vmatprep.subr.mxu0 0.0
        %701 = vmatpush1.msra.mxu0 0.0
        %702 = vmatprep.subr.mxu0 0.0
        %v703 = vand.u32 %v370, 4294901760
        %v704 = vsub.f32 %v370, %v703
        %v705 = vand.u32 %v704, 4294901760
        %706 = vmatpush1.msra.mxu0 %v705
        %707 = vmatprep.subr.mxu0 0.0
        %708 = vmatpush2.msra.mxu0 0.0
        %709 = vmatprep.subr.mxu0 0.0
        %710 = vmatpush2.msra.mxu0 0.0
        %711 = vmatprep.subr.mxu0 0.0
        %712 = vmatpush2.msra.mxu0 0.0
        %713 = vmatprep.subr.mxu0 0.0
        %714 = vmatpush2.msra.mxu0 0.0
        %715 = vmatprep.subr.mxu0 0.0
        %716 = vmatpush2.msra.mxu0 0.0
        %717 = vmatprep.subr.mxu0 0.0
        %718 = vmatpush2.msra.mxu0 0.0
        %719 = vmatprep.subr.mxu0 0.0
        %720 = vmatpush2.msra.mxu0 0.0
        %721 = vmatprep.subr.mxu0 0.0
        %722 = vmatpush2.msra.mxu0 0.0
        %723 = vmatprep.subr.mxu0 0.0
        %724 = vmatpush2.msra.mxu0 0.0
        %725 = vmatprep.subr.mxu0 0.0
        %726 = vmatpush2.msra.mxu0 0.0
        %727 = vmatprep.subr.mxu0 0.0
        %728 = vmatpush2.msra.mxu0 0.0
        %729 = vmatprep.subr.mxu0 0.0
        %730 = vmatpush2.msra.mxu0 0.0
        %731 = vmatprep.subr.mxu0 0.0
        %732 = vmatpush2.msra.mxu0 0.0
        %733 = vmatprep.subr.mxu0 0.0
        %734 = vmatpush2.msra.mxu0 0.0
        %735 = vmatprep.subr.mxu0 0.0
        %736 = vmatpush2.msra.mxu0 0.0
        %737 = vmatprep.subr.mxu0 0.0
        %738 = vmatpush2.msra.mxu0 0.0
        %739 = vmatprep.mubr.f32.mxu0 0.0
        %v740 = vand.u32 %v366, 4294901760
        %741 = vmatmul.mubr.f32.gmra.mxu0 %v740
        %v742 = vpop.f32.mrf.mxu0
        %v743 = vadd.f32 %v669, %v742
        %v744 = vpop.f32.mrf.mxu0
        %745 = vdwg.mxu0
        %746 = vmatprep.subr.mxu0 0.0
        %747 = vmatpush1.msra.mxu0 0.0
        %748 = vmatprep.subr.mxu0 0.0
        %749 = vmatpush1.msra.mxu0 0.0
        %750 = vmatprep.subr.mxu0 0.0
        %751 = vmatpush1.msra.mxu0 0.0
        %752 = vmatprep.subr.mxu0 0.0
        %753 = vmatpush1.msra.mxu0 0.0
        %754 = vmatprep.subr.mxu0 0.0
        %755 = vmatpush1.msra.mxu0 0.0
        %756 = vmatprep.subr.mxu0 0.0
        %757 = vmatpush1.msra.mxu0 0.0
        %758 = vmatprep.subr.mxu0 0.0
        %759 = vmatpush1.msra.mxu0 0.0
        %760 = vmatprep.subr.mxu0 0.0
        %761 = vmatpush1.msra.mxu0 0.0
        %762 = vmatprep.subr.mxu0 0.0
        %763 = vmatpush1.msra.mxu0 0.0
        %764 = vmatprep.subr.mxu0 0.0
        %765 = vmatpush1.msra.mxu0 0.0
        %766 = vmatprep.subr.mxu0 0.0
        %767 = vmatpush1.msra.mxu0 0.0
        %768 = vmatprep.subr.mxu0 0.0
        %769 = vmatpush1.msra.mxu0 0.0
        %770 = vmatprep.subr.mxu0 0.0
        %771 = vmatpush1.msra.mxu0 0.0
        %772 = vmatprep.subr.mxu0 0.0
        %773 = vmatpush1.msra.mxu0 0.0
        %774 = vmatprep.subr.mxu0 0.0
        %775 = vmatpush1.msra.mxu0 0.0
        %776 = vmatprep.subr.mxu0 0.0
        %v777 = vand.u32 %v370, 4294901760
        %778 = vmatpush1.msra.mxu0 %v777
        %779 = vmatprep.subr.mxu0 0.0
        %780 = vmatpush2.msra.mxu0 0.0
        %781 = vmatprep.subr.mxu0 0.0
        %782 = vmatpush2.msra.mxu0 0.0
        %783 = vmatprep.subr.mxu0 0.0
        %784 = vmatpush2.msra.mxu0 0.0
        %785 = vmatprep.subr.mxu0 0.0
        %786 = vmatpush2.msra.mxu0 0.0
        %787 = vmatprep.subr.mxu0 0.0
        %788 = vmatpush2.msra.mxu0 0.0
        %789 = vmatprep.subr.mxu0 0.0
        %790 = vmatpush2.msra.mxu0 0.0
        %791 = vmatprep.subr.mxu0 0.0
        %792 = vmatpush2.msra.mxu0 0.0
        %793 = vmatprep.subr.mxu0 0.0
        %794 = vmatpush2.msra.mxu0 0.0
        %795 = vmatprep.subr.mxu0 0.0
        %796 = vmatpush2.msra.mxu0 0.0
        %797 = vmatprep.subr.mxu0 0.0
        %798 = vmatpush2.msra.mxu0 0.0
        %799 = vmatprep.subr.mxu0 0.0
        %800 = vmatpush2.msra.mxu0 0.0
        %801 = vmatprep.subr.mxu0 0.0
        %802 = vmatpush2.msra.mxu0 0.0
        %803 = vmatprep.subr.mxu0 0.0
        %804 = vmatpush2.msra.mxu0 0.0
        %805 = vmatprep.subr.mxu0 0.0
        %806 = vmatpush2.msra.mxu0 0.0
        %807 = vmatprep.subr.mxu0 0.0
        %808 = vmatpush2.msra.mxu0 0.0
        %809 = vmatprep.subr.mxu0 0.0
        %810 = vmatpush2.msra.mxu0 0.0
        %811 = vmatprep.mubr.f32.mxu0 0.0
        %v812 = vand.u32 %v366, 4294901760
        %813 = vmatmul.mubr.f32.gmra.mxu0 %v812
        %v814 = vpop.f32.mrf.mxu0
        %v815 = vadd.f32 %v743, %v814
        %v816 = vpop.f32.mrf.mxu0
        %817 = vdwg.mxu0
        %v818 = vlaneseq
        %v819 = vshrl.u32 %v818, 7
        %v820 = vsub.s32 0, %v819
        %v821 = vrot.slane %v315, %v820
        %822 = vset.pattern.permute.xlu0 0
        %823 = vperm.xlu0 %822, %v314
        %v824 = vpop.permute.xlu0 %823
        %v826 = vsub.f32 %v821, %v824
        %v827 = vand.u32 2147483647, %v826
        %v828 = vlaneseq
        %v829 = vshrl.u32 %v828, 7
        %v830 = vsub.s32 1, %v829
        %v831 = vrot.slane %v315, %v830
        %832 = vset.pattern.permute.xlu0 1
        %833 = vperm.xlu0 %832, %v314
        %v834 = vpop.permute.xlu0 %833
        %v836 = vsub.f32 %v831, %v834
        %v837 = vand.u32 2147483647, %v836
        %v838 = vadd.f32 %v827, %v837
        %v839 = vlaneseq
        %v840 = vshrl.u32 %v839, 7
        %v841 = vsub.s32 2, %v840
        %v842 = vrot.slane %v315, %v841
        %843 = vset.pattern.permute.xlu0 2
        %844 = vperm.xlu0 %843, %v314
        %v845 = vpop.permute.xlu0 %844
        %v847 = vsub.f32 %v842, %v845
        %v848 = vand.u32 2147483647, %v847
        %v849 = vadd.f32 %v838, %v848
        %v850 = vlaneseq
        %v851 = vshrl.u32 %v850, 7
        %v852 = vsub.s32 3, %v851
        %v853 = vrot.slane %v315, %v852
        %854 = vset.pattern.permute.xlu0 3
        %855 = vperm.xlu0 %854, %v314
        %v856 = vpop.permute.xlu0 %855
        %v858 = vsub.f32 %v853, %v856
        %v859 = vand.u32 2147483647, %v858
        %v860 = vadd.f32 %v849, %v859
        %861 = vset.pattern.permute.xlu0 18
        %862 = vperm.xlu0 %861, %v314
        %v863 = vpop.permute.xlu0 %862
        %v865 = vmul.f32 %v860, %v863
        %v866 = vadd.f32 %v815, %v865
        %v867 = vlaneseq
        %v868 = vshrl.u32 %v867, 7
        %v869 = vsub.s32 4, %v868
        %v870 = vrot.slane %v315, %v869
        %871 = vset.pattern.permute.xlu0 4
        %872 = vperm.xlu0 %871, %v314
        %v873 = vpop.permute.xlu0 %872
        %v875 = vsub.f32 %v870, %v873
        %v876 = vand.u32 2147483647, %v875
        %v877 = vlaneseq
        %v878 = vshrl.u32 %v877, 7
        %v879 = vsub.s32 5, %v878
        %v880 = vrot.slane %v315, %v879
        %881 = vset.pattern.permute.xlu0 5
        %882 = vperm.xlu0 %881, %v314
        %v883 = vpop.permute.xlu0 %882
        %v885 = vsub.f32 %v880, %v883
        %v886 = vand.u32 2147483647, %v885
        %v887 = vadd.f32 %v876, %v886
        %v888 = vlaneseq
        %v889 = vshrl.u32 %v888, 7
        %v890 = vsub.s32 6, %v889
        %v891 = vrot.slane %v315, %v890
        %892 = vset.pattern.permute.xlu0 6
        %893 = vperm.xlu0 %892, %v314
        %v894 = vpop.permute.xlu0 %893
        %v896 = vsub.f32 %v891, %v894
        %v897 = vand.u32 2147483647, %v896
        %v898 = vadd.f32 %v887, %v897
        %v899 = vlaneseq
        %v900 = vshrl.u32 %v899, 7
        %v901 = vsub.s32 7, %v900
        %v902 = vrot.slane %v315, %v901
        %903 = vset.pattern.permute.xlu0 7
        %904 = vperm.xlu0 %903, %v314
        %v905 = vpop.permute.xlu0 %904
        %v907 = vsub.f32 %v902, %v905
        %v908 = vand.u32 2147483647, %v907
        %v909 = vadd.f32 %v898, %v908
        %910 = vset.pattern.permute.xlu0 19
        %911 = vperm.xlu0 %910, %v314
        %v912 = vpop.permute.xlu0 %911
        %v914 = vmul.f32 %v909, %v912
        %v915 = vadd.f32 %v866, %v914
        %v916 = vlaneseq
        %v917 = vshrl.u32 %v916, 7
        %v918 = vsub.s32 0, %v917
        %v919 = vrot.slane %v316, %v918
        %920 = vset.pattern.permute.xlu0 8
        %921 = vperm.xlu0 %920, %v314
        %v922 = vpop.permute.xlu0 %921
        %v924 = vsub.f32 %v919, %v922
        %v925 = vand.u32 2147483647, %v924
        %v926 = vlaneseq
        %v927 = vshrl.u32 %v926, 7
        %v928 = vsub.s32 1, %v927
        %v929 = vrot.slane %v316, %v928
        %930 = vset.pattern.permute.xlu0 9
        %931 = vperm.xlu0 %930, %v314
        %v932 = vpop.permute.xlu0 %931
        %v934 = vsub.f32 %v929, %v932
        %v935 = vand.u32 2147483647, %v934
        %v936 = vadd.f32 %v925, %v935
        %v937 = vlaneseq
        %v938 = vshrl.u32 %v937, 7
        %v939 = vsub.s32 2, %v938
        %v940 = vrot.slane %v316, %v939
        %941 = vset.pattern.permute.xlu0 10
        %942 = vperm.xlu0 %941, %v314
        %v943 = vpop.permute.xlu0 %942
        %v945 = vsub.f32 %v940, %v943
        %v946 = vand.u32 2147483647, %v945
        %v947 = vadd.f32 %v936, %v946
        %v948 = vlaneseq
        %v949 = vshrl.u32 %v948, 7
        %v950 = vsub.s32 3, %v949
        %v951 = vrot.slane %v316, %v950
        %952 = vset.pattern.permute.xlu0 11
        %953 = vperm.xlu0 %952, %v314
        %v954 = vpop.permute.xlu0 %953
        %v956 = vsub.f32 %v951, %v954
        %v957 = vand.u32 2147483647, %v956
        %v958 = vadd.f32 %v947, %v957
        %v959 = vlaneseq
        %v960 = vshrl.u32 %v959, 7
        %v961 = vsub.s32 4, %v960
        %v962 = vrot.slane %v316, %v961
        %963 = vset.pattern.permute.xlu0 12
        %964 = vperm.xlu0 %963, %v314
        %v965 = vpop.permute.xlu0 %964
        %v967 = vsub.f32 %v962, %v965
        %v968 = vand.u32 2147483647, %v967
        %v969 = vadd.f32 %v958, %v968
        %v970 = vlaneseq
        %v971 = vshrl.u32 %v970, 7
        %v972 = vsub.s32 5, %v971
        %v973 = vrot.slane %v316, %v972
        %974 = vset.pattern.permute.xlu0 13
        %975 = vperm.xlu0 %974, %v314
        %v976 = vpop.permute.xlu0 %975
        %v978 = vsub.f32 %v973, %v976
        %v979 = vand.u32 2147483647, %v978
        %v980 = vadd.f32 %v969, %v979
        %981 = vset.pattern.permute.xlu0 20
        %982 = vperm.xlu0 %981, %v314
        %v983 = vpop.permute.xlu0 %982
        %v985 = vmul.f32 %v980, %v983
        %v986 = vadd.f32 %v915, %v985
        %987 = vst [vmem:[%s284] sm:$0xff] %v986
        %s988 = sand.u32 %s161, 1
        %s989 = scalar_lea.sflag [#allocation3], %s988
        %s990 = sand.u32 %s161, 1
        %s991 = smul.addr %s990, 8
        %s992 = scalar_lea.vmem [#allocation2], %s991
        // Predicated region
        $region37: #{tpu_custom_call.1} parent=35 // pred_check
          %p993 = pneg %p171
        $region38: #{tpu_custom_call.1} parent=35 // pred_check_branch
          %995 = sbr.rel (%p993) target = $region40
        $region39: #{tpu_custom_call.1} parent=35 // pred_region
          %s997 = ssub.s32 128, 128
          %998 = vsyncadd %s989, %s997
          %s999 = sadd.s32 %s25, %s24
          %s1000 = sadd.s32 %s999, %s23
          %s1001 = smul.addr %s1000, 128
          %s1002 = scalar_lea.hbm %s4, %s1001
          %s1004 = sshll.u32 %s992, 4
          %s1005 = int_to_ptr.vmem [resolvable:$true] %s1004
          %1007 = dma.vmem_to_hbm [thread:$0]  %s1005, 128, %s1002, %s989
        $region40: #{tpu_custom_call.1} parent=35 // pred_fallthru
          _
      $region36: #{tpu_custom_call.1} parent=5 // pred_fallthru
        _
      %p1008 = scmp.le.s32.totalorder 2, %s13
      // Predicated region
      $region41: #{tpu_custom_call.1} parent=5 // pred_check
        %p1009 = pneg %p1008
      $region42: #{tpu_custom_call.1} parent=5 // pred_check_branch
        %1011 = sbr.rel (%p1009) target = $region44
      $region43: #{tpu_custom_call.1} parent=5 // pred_region
        %s1012 = ssub.s32 %s13, 2
        // Predicated region
        $region45: #{tpu_custom_call.1} parent=43 // pred_check
          %p1013 = pneg %p177
        $region46: #{tpu_custom_call.1} parent=43 // pred_check_branch
          %1015 = sbr.rel (%p1013) target = $region48
        $region47: #{tpu_custom_call.1} parent=43 // pred_region
          %s1016 = sand.u32 %s162, 1
          %s1017 = scalar_lea.sflag [#allocation3], %s1016
          %s1018 = sand.u32 %s162, 1
          %s1019 = smul.addr %s1018, 8
          %s1020 = scalar_lea.vmem [#allocation2], %s1019
          %1021 = dma.done %s1017, 128
        $region48: #{tpu_custom_call.1} parent=43 // pred_fallthru
          _
      $region44: #{tpu_custom_call.1} parent=5 // pred_fallthru
        _
    $region6: #{tpu_custom_call.1} parent=1 // loop_footer
      %s17 = sadd.s32 1, %s13
    $region7: #{tpu_custom_call.1} parent=1 // loop_footer_branch
      %12 = sbr.rel target = $region3
    $region8: #{tpu_custom_call.1} parent=1 // loop_exit
      _
    %1022 = vsyncpa [#allocation3], 1
    %s1023 = scalar_lea.sflag [#allocation3], 1
    %1024 = vsyncpa %s1023, 1

</llo_original>
